<compile_context>
chip_gen: v6e
topology: v6e:2x2x1
jax: 0.10.0
libtpu: 0.0.40
codegen_flags: <defaults>
</compile_context>

<pallas_src>
import functools

import jax
import jax.numpy as jnp
from jax.experimental import pallas as pl
from jax.experimental.pallas import tpu as pltpu

_F32_MIN = float(jnp.finfo(jnp.float32).min)
_VMEM_LIMIT = 48 * 1024 * 1024  # generous but <= v7x's 64 MiB physical VMEM


def _round_up(x, m):
    return (x + m - 1) // m * m


def _sigmoid(x):
    # predictive = 'logit' -> both the predictive and the activation are sigmoid.
    # tanh form: one EUP op + 2 VALU ops (cheaper than exp + f32 divide).
    return 0.5 * jnp.tanh(0.5 * x) + 0.5


# --------------------------- NLL term (rows 0..C-1) ---------------------------
def _nll_kernel(tgt_ref, x_ref, out_ref, *, c):
    """One (cb, C) chunk of the first C logits rows per grid step.

    tgt_ref : (cb, 1) i32 chunk of targets
    x_ref   : (cb, C) chunk of logits rows (native dtype)
    out_ref : (1, 1) f32 resident accumulator
    """
    pid = pl.program_id(0)
    cb = x_ref.shape[0]

    @pl.when(pid == 0)
    def _():
        out_ref[...] = jnp.zeros_like(out_ref)

    preds = _sigmoid(x_ref[...].astype(jnp.float32))                    # (cb, C)
    col_ids = jax.lax.broadcasted_iota(jnp.int32, preds.shape, 1)
    onehot = (col_ids == tgt_ref[...]).astype(jnp.float32)              # (cb, C)
    # Gather first, then log: C transcendentals total instead of N*C.
    gathered = jnp.sum(onehot * preds, axis=-1, keepdims=True)          # (cb, 1)
    row_ids = jax.lax.broadcasted_iota(jnp.int32, (cb, 1), 0) + pid * cb
    # NaN-safe mask: rows >= C (block padding past the array) never contribute.
    logp = jnp.where(row_ids < c,
                     jnp.maximum(jnp.log(gathered), _F32_MIN),
                     0.0)
    out_ref[...] += jnp.sum(-logp, axis=(0, 1), keepdims=True) * (1.0 / c)


# ------------------- Regularizer term (lane-packed streaming) -----------------
def _reg_kernel(x_ref, out_ref, *, n, c, g):
    """One (tm, g*C) lane-packed tile per grid step (g samples per packed row).

    x_ref   : (tm, g*C) packed logits tile (native dtype)
    out_ref : (1, 1, 1) f32 per-tile partial sum of (sum_c sigmoid(x) - 1)^2
    """
    pid = pl.program_id(0)
    tm, lanes = x_ref.shape

    acts = _sigmoid(x_ref[...].astype(jnp.float32))                     # (tm, g*C)

    # Segmented lane-sum via a tiny constant (g*C, g) one-hot matrix on the MXU
    # (avoids an in-kernel lane-axis reshape / cross-lane XLU reduction).
    lane_grp = jax.lax.broadcasted_iota(jnp.int32, (lanes, g), 0) // c
    grp_ids = jax.lax.broadcasted_iota(jnp.int32, (lanes, g), 1)
    seg = (lane_grp == grp_ids).astype(jnp.float32)
    samp_sum = jnp.dot(acts, seg, preferred_element_type=jnp.float32)   # (tm, g)

    # NaN-safe validity mask on the global sample index: covers both the
    # zero-padded tail samples and garbage rows of a partial last block.
    row_ids = jax.lax.broadcasted_iota(jnp.int32, (tm, g), 0) + pid * tm
    col_ids = jax.lax.broadcasted_iota(jnp.int32, (tm, g), 1)
    sample_idx = row_ids * g + col_ids
    sq = jnp.where(sample_idx < n, jnp.square(samp_sum - 1.0), 0.0)
    out_ref[...] = jnp.sum(sq, axis=(0, 1), keepdims=True).reshape(1, 1, 1)


def _choose_packed_tile_rows(np_rows, lanes, itemsize):
    # Budget on PADDED VMEM bytes (lanes rounded up to 128): ~4 MiB per block,
    # ~8 MiB double-buffered -- well under v7x's 64 MiB VMEM (and every
    # generation's scoped default), while each grid step moves multiple MiB of
    # HBM so the fixed per-step overhead is amortised.
    row_bytes = _round_up(lanes, 128) * max(1, itemsize)
    budget_bytes = 4 * 1024 * 1024
    tm = max(1, budget_bytes // row_bytes)
    if tm >= np_rows:
        return np_rows                    # single tile: block == full packed dim
    tm = max(8, (tm // 8) * 8)            # sublane-aligned, rounded down (stay in budget)
    return min(tm, np_rows)


def regularized_predictive_nll_loss(logits, targets, regularization_factor):
    n, c = logits.shape
    assert targets.shape == (c,), "targets must have length C = logits.shape[-1]"
    assert n >= c, "reference indexing preds[arange(C), targets] needs N >= C"
    reg_factor = float(regularization_factor)

    # ---------------- NLL term: rows 0..C-1 only (tiny, separate call) -------
    cb = min(256, _round_up(c, 8))        # bounds the (cb, C) one-hot vreg pressure
    tgt_col = targets.astype(jnp.int32).reshape(c, 1)
    nll = pl.pallas_call(
        functools.partial(_nll_kernel, c=c),
        out_shape=jax.ShapeDtypeStruct((1, 1), jnp.float32),
        grid_spec=pltpu.PrefetchScalarGridSpec(
            num_scalar_prefetch=0,
            grid=(pl.cdiv(c, cb),),
            in_specs=[
                pl.BlockSpec((cb, 1), lambda i: (i, 0)),   # targets chunk
                pl.BlockSpec((cb, c), lambda i: (i, 0)),   # logits rows chunk
            ],
            out_specs=pl.BlockSpec((1, 1), lambda i: (0, 0)),
        ),
        compiler_params=pltpu.CompilerParams(
            dimension_semantics=("arbitrary",),            # accumulates over chunks
            vmem_limit_bytes=_VMEM_LIMIT,
        ),
    )(tgt_col, logits)

    # -------- Regularizer: lane-dense packed streaming reduction -------------
    g = max(1, 128 // c)                  # samples packed per (>=128-lane) row
    n_pad = _round_up(n, g)
    if n_pad // g < 8:                    # keep >=8 packed rows (sublane-friendly,
        n_pad = 8 * g                     # avoids tiny-M matmuls); cheap: N < 8*g here
    if n_pad != n:
        # TODO(synk): the zero-pad costs one extra HBM pass when N % g != 0 for
        # large N; a split main/tail kernel would avoid it.
        logits_p = jnp.pad(logits, ((0, n_pad - n), (0, 0)))
    else:
        logits_p = logits
    np_rows = n_pad // g
    lanes = g * c
    packed = logits_p.reshape(np_rows, lanes)   # row-major reinterpret; no shuffle

    tm = _choose_packed_tile_rows(np_rows, lanes, logits.dtype.itemsize)
    num_tiles = pl.cdiv(np_rows, tm)

    reg_partials = pl.pallas_call(
        functools.partial(_reg_kernel, n=n, c=c, g=g),
        out_shape=jax.ShapeDtypeStruct((num_tiles, 1, 1), jnp.float32),
        grid_spec=pltpu.PrefetchScalarGridSpec(
            num_scalar_prefetch=0,
            grid=(num_tiles,),
            in_specs=[pl.BlockSpec((tm, lanes), lambda i: (i, 0))],
            out_specs=pl.BlockSpec((1, 1, 1), lambda i: (i, 0, 0)),
        ),
        compiler_params=pltpu.CompilerParams(
            # Independent per-tile partials -> v7x megacore can split the rows.
            dimension_semantics=("parallel",),
            vmem_limit_bytes=_VMEM_LIMIT,
        ),
    )(packed)

    # TODO(synk): torch evaluates the regularizer activation in float64; TPU has
    # no native f64, so both terms (and this final reduction) are float32.
    reg = jnp.sum(reg_partials) * (1.0 / n)
    return nll[0, 0] + reg_factor * reg


def _reference(logits, targets, reg_factor):
    """Pure-JAX replica of the torch forward (float32 activation, see TODO)."""
    logits = logits.astype(jnp.float32)
    preds = jax.nn.sigmoid(logits)
    c = preds.shape[-1]
    gathered = preds[jnp.arange(c), targets]
    nll = jnp.mean(-jnp.maximum(jnp.log(gathered), _F32_MIN))
    reg = jnp.mean((jnp.sum(jax.nn.sigmoid(logits), axis=-1) - 1.0) ** 2)
    return nll + reg_factor * reg


if __name__ == "__main__":
    key = jax.random.PRNGKey(0)
    k_logits, k_targets = jax.random.split(key)

    N, C = 16, 8                      # small synthetic shapes: 16 samples, 8 classes
    logits = jax.random.normal(k_logits, (N, C), dtype=jnp.float32)
    targets = jax.random.randint(k_targets, (C,), 0, C, dtype=jnp.int32)
    reg_factor = 0.05

    loss = regularized_predictive_nll_loss(logits, targets, reg_factor)
    jax.block_until_ready(loss)

    ref = _reference(logits, targets, reg_factor)
    if not jnp.allclose(loss, ref, rtol=1e-5, atol=1e-5):
        raise AssertionError(f"Pallas loss {loss} != reference {ref}")

    print("KERNEL_OK")
</pallas_src>

<mosaic_0001>
module attributes {stable_mosaic.version = 11 : i64} {
  func.func @_nll_kernel(%arg0: i32, %arg1: memref<8x1xi32, #tpu.memory_space<vmem>>, %arg2: memref<8x8xf32, #tpu.memory_space<vmem>>, %arg3: memref<1x1xf32, #tpu.memory_space<vmem>>) attributes {dimension_semantics = [#tpu.dimension_semantics<arbitrary>], iteration_bounds = array<i64: 1>, scalar_prefetch = 0 : i64, scratch_operands = 0 : i64, tpu.core_type = #tpu.core_type<tc>, window_params = [{transform_indices = @transform_0, window_bounds = array<i64: 8, 1>}, {transform_indices = @transform_1, window_bounds = array<i64: 8, 8>}, {pipeline_mode = #tpu.pipeline_mode<synchronous>, transform_indices = @transform_2, window_bounds = array<i64: 1, 1>}]} {
    %c0_i32 = arith.constant 0 : i32
    %0 = arith.cmpi eq, %arg0, %c0_i32 : i32
    %1 = arith.extui %0 : i1 to i32
    %c0_i32_0 = arith.constant 0 : i32
    %2 = arith.cmpi ne, %1, %c0_i32_0 : i32
    scf.if %2 {
      %cst_17 = arith.constant 0.000000e+00 : f32
      %43 = vector.broadcast %cst_17 : f32 to vector<1x1xf32>
      %c0_18 = arith.constant 0 : index
      %c0_19 = arith.constant 0 : index
      %44 = vector.load %arg3[%c0_18, %c0_19] : memref<1x1xf32, #tpu.memory_space<vmem>>, vector<1x1xf32>
      tpu.vector_store %arg3[%c0_18, %c0_19], %43 {strides = array<i32>} : memref<1x1xf32, #tpu.memory_space<vmem>>, vector<1x1xf32>,
    } else {
    }
    %c0 = arith.constant 0 : index
    %c0_1 = arith.constant 0 : index
    %3 = vector.load %arg2[%c0, %c0_1] : memref<8x8xf32, #tpu.memory_space<vmem>>, vector<8x8xf32>
    %cst = arith.constant 5.000000e-01 : f32
    %4 = vector.broadcast %cst : f32 to vector<8x8xf32>
    %5 = arith.mulf %4, %3 : vector<8x8xf32>
    %6 = math.tanh %5 : vector<8x8xf32>
    %cst_2 = arith.constant 5.000000e-01 : f32
    %7 = vector.broadcast %cst_2 : f32 to vector<8x8xf32>
    %8 = arith.mulf %7, %6 : vector<8x8xf32>
    %cst_3 = arith.constant 5.000000e-01 : f32
    %9 = vector.broadcast %cst_3 : f32 to vector<8x8xf32>
    %10 = arith.addf %8, %9 : vector<8x8xf32>
    %11 = tpu.iota {dimensions = array<i32: 1>} : vector<8x8xi32>
    %c0_4 = arith.constant 0 : index
    %c0_5 = arith.constant 0 : index
    %12 = vector.load %arg1[%c0_4, %c0_5] : memref<8x1xi32, #tpu.memory_space<vmem>>, vector<8x1xi32>
    %13 = vector.broadcast %12 : vector<8x1xi32> to vector<8x8xi32>
    %14 = arith.cmpi eq, %11, %13 : vector<8x8xi32>
    %15 = arith.extui %14 : vector<8x8xi1> to vector<8x8xi32>
    %16 = arith.sitofp %15 : vector<8x8xi32> to vector<8x8xf32>
    %17 = arith.mulf %16, %10 : vector<8x8xf32>
    %cst_6 = arith.constant dense<0.000000e+00> : vector<8xf32>
    %18 = vector.multi_reduction <add>, %17, %cst_6 [1] : vector<8x8xf32> to vector<8xf32>
    %19 = vector.shape_cast %18 : vector<8xf32> to vector<8x1xf32>
    %20 = tpu.iota {dimensions = array<i32: 0>} : vector<8x1xi32>
    %c8_i32 = arith.constant 8 : i32
    %21 = arith.muli %arg0, %c8_i32 : i32
    %22 = vector.broadcast %21 : i32 to vector<8x1xi32>
    %23 = arith.addi %20, %22 : vector<8x1xi32>
    %c8_i32_7 = arith.constant 8 : i32
    %24 = vector.broadcast %c8_i32_7 : i32 to vector<8x1xi32>
    %25 = arith.cmpi slt, %23, %24 : vector<8x1xi32>
    %26 = math.log %19 : vector<8x1xf32>
    %cst_8 = arith.constant -3.40282347E+38 : f32
    %27 = vector.broadcast %cst_8 : f32 to vector<8x1xf32>
    %28 = arith.maximumf %26, %27 : vector<8x1xf32>
    %cst_9 = arith.constant 0.000000e+00 : f32
    %29 = vector.broadcast %cst_9 : f32 to vector<8x1xf32>
    %30 = arith.select %25, %28, %29 : vector<8x1xi1>, vector<8x1xf32>
    %c0_10 = arith.constant 0 : index
    %c0_11 = arith.constant 0 : index
    %31 = vector.load %arg3[%c0_10, %c0_11] : memref<1x1xf32, #tpu.memory_space<vmem>>, vector<1x1xf32>
    %cst_12 = arith.constant 0.000000e+00 : f32
    %32 = vector.broadcast %cst_12 : f32 to vector<8x1xf32>
    %33 = arith.subf %32, %30 : vector<8x1xf32>
    %34 = vector.shape_cast %33 : vector<8x1xf32> to vector<1x8x1xf32>
    %cst_13 = arith.constant dense<0.000000e+00> : vector<1xf32>
    %35 = vector.multi_reduction <add>, %34, %cst_13 [1, 2] : vector<1x8x1xf32> to vector<1xf32>
    %36 = vector.shape_cast %35 : vector<1xf32> to vector<1x1x1xf32>
    %37 = vector.extract %36[0, 0, 0] : f32 from vector<1x1x1xf32>
    %38 = vector.broadcast %37 : f32 to vector<1x1xf32>
    %cst_14 = arith.constant 1.250000e-01 : f32
    %39 = vector.broadcast %cst_14 : f32 to vector<1x1xf32>
    %40 = arith.mulf %38, %39 : vector<1x1xf32>
    %41 = arith.addf %31, %40 : vector<1x1xf32>
    %c0_15 = arith.constant 0 : index
    %c0_16 = arith.constant 0 : index
    %42 = vector.load %arg3[%c0_15, %c0_16] : memref<1x1xf32, #tpu.memory_space<vmem>>, vector<1x1xf32>
    tpu.vector_store %arg3[%c0_15, %c0_16], %41 {strides = array<i32>} : memref<1x1xf32, #tpu.memory_space<vmem>>, vector<1x1xf32>,
    return
  }
  func.func @transform_0(%arg0: i32) -> (i32, i32) {
    %c0_i32 = arith.constant 0 : i32
    %c0_i32_0 = arith.constant 0 : i32
    return %arg0, %c0_i32 : i32, i32
  }
  func.func @transform_1(%arg0: i32) -> (i32, i32) {
    %c0_i32 = arith.constant 0 : i32
    %c0_i32_0 = arith.constant 0 : i32
    return %arg0, %c0_i32 : i32, i32
  }
  func.func @transform_2(%arg0: i32) -> (i32, i32) {
    %c0_i32 = arith.constant 0 : i32
    %c0_i32_0 = arith.constant 0 : i32
    %c0_i32_1 = arith.constant 0 : i32
    return %c0_i32, %c0_i32_0 : i32, i32
  }
}

</mosaic_0001>

<llo_original>
// kernel: tpu_custom_call.1
$region0: #{tpu_custom_call.1}
  #allocation0 [shape = 'u32[]', space=smem, size = 0x4, offset = 0x4, fixed_abs, tag = 'smem constant byte address 0x4 - core index']
  #allocation1 [shape = 'u32[144,128]{1,0:T(1,128)}', space=vmem, size = 0x12000, scoped, tag = 'internal scratch']
  %s0 = inlined_call_operand.vmem [shape: s32[8,1], index: 0, kind: input, shape index: {}]
  %s1 = inlined_call_operand.vmem [shape: f32[16,8], index: 1, kind: input, shape index: {}]
  %s2 = inlined_call_operand.hbm [shape: f32[1,1], index: 2, kind: output, shape index: {}]
  %s3 = sld [smem:[#allocation0]]
  $region22: #{tpu_custom_call.1} parent=0
    _
  %s5 = ssub.s32 1, %s3
  %s6 = scalar_select 0, %s5, %s3
  $region1: #{tpu_custom_call.1} parent=0
    #allocation2 [shape = 'u8[512]{0}', space=vmem, size = 0x400, scoped, tag = 'output window, operand 0, single buffered']
    #allocation3 [shape = 's32[1]{0}', space=sflag, size = 0x4, scoped, tag = 'scoped memory for tpu_custom_call.1']
    %7 = vsyncpa [#allocation3], 0
    // Predicated region
    $region2: #{tpu_custom_call.1} parent=1 // pred_check
      _
    $region3: #{tpu_custom_call.1} parent=1 // pred_check_branch
      %9 = sbr.rel (0) target = $region5
    $region4: #{tpu_custom_call.1} parent=1 // pred_region
      _
    $region5: #{tpu_custom_call.1} parent=1 // pred_fallthru
      _
    // Predicated region
    $region6: #{tpu_custom_call.1} parent=1 // pred_check
      _
    $region7: #{tpu_custom_call.1} parent=1 // pred_check_branch
      %11 = sbr.rel (0) target = $region9
    $region8: #{tpu_custom_call.1} parent=1 // pred_region
      _
    $region9: #{tpu_custom_call.1} parent=1 // pred_fallthru
      _
    %p12 = scmp.eq.s32.totalorder 0, 0
    // Predicated region
    $region10: #{tpu_custom_call.1} parent=1 // pred_check
      %p13 = pneg %p12
    $region11: #{tpu_custom_call.1} parent=1 // pred_check_branch
      %15 = sbr.rel (%p13) target = $region13
    $region12: #{tpu_custom_call.1} parent=1 // pred_region
      %vm16 = vcmask 0
      %17 = vst.msk [vmem:[#allocation2] sm:$0x1] %vm16, 0.0
    $region13: #{tpu_custom_call.1} parent=1 // pred_fallthru
      _
    %v18 = vld [vmem:[%s1] sm:$0xff]
    %v19 = vmul.f32 %v18, 0.5
    %v20 = vtanh.pop %v19
    %v21 = vmul.f32 %v20, 0.5
    %v22 = vadd.f32 %v21, 0.5
    %v23 = vlaneseq
    %v24 = vand.u32 %v23, 127
    %v25 = vld [vmem:[%s0] sm:$0xff]
    %26 = vset.pattern.permute.xlu0 0
    %27 = vperm.xlu0 %26, %v25
    %v28 = vpop.permute.xlu0 %27
    %vm29 = vcmp.eq.s32.totalorder %v24, %v28
    %v30 = vsel %vm29, 1, 0
    %v31 = vcvt.s32.f32 %v30
    %v32 = vmul.f32 %v31, %v22
    %vm33 = vcmask 64512
    %v34 = vsel %vm33, %v32, 0.0
    %35 = vadd.xlane.f32.xlu0 %v34
    %v36 = vpop.xlane.xlu0 %35
    %v37 = vlaneseq
    %v38 = vshrl.u32 %v37, 7
    %s39 = smul.u32 0, 8
    %v40 = vstv %s39
    %v41 = vadd.s32 %v38, %v40
    %vm42 = vcmp.lt.s32.totalorder %v41, 8
    %v43 = vlog2.pop %v36
    %v44 = vmul.f32 %v43, 0.6931472
    %v45 = vmax.f32 %v44, -3.4028235e+38
    %v46 = vsel %vm42, %v45, 0.0
    %v47 = vld [vmem:[#allocation2] sm:$0x1]
    %v48 = vsub.f32 0.0, %v46
    %vm49 = vcmask 7168
    %v50 = vsel %vm49, %v48, 0.0
    %51 = vadd.xlane.f32.xlu0 %v50
    %v52 = vpop.xlane.xlu0 %51
    %v53 = vrot.slane %v52, 4
    %v54 = vadd.f32 %v52, %v53
    %v55 = vrot.slane %v54, 2
    %v56 = vadd.f32 %v54, %v55
    %v57 = vrot.slane %v56, 1
    %v58 = vadd.f32 %v56, %v57
    %s59 = vtos %v58
    %v60 = vstv %s59
    %v61 = vmul.f32 %v60, 0.125
    %v62 = vadd.f32 %v47, %v61
    %vm63 = vcmask 0
    %64 = vst.msk [vmem:[#allocation2] sm:$0x1] %vm63, %v62
    // Predicated region
    $region14: #{tpu_custom_call.1} parent=1 // pred_check
      _
    $region15: #{tpu_custom_call.1} parent=1 // pred_check_branch
      %66 = sbr.rel (0) target = $region17
    $region16: #{tpu_custom_call.1} parent=1 // pred_region
      %s68 = ssub.s32 16, 16
      %69 = vsyncadd [#allocation3], %s68
      %s71 = sshll.u32 [#allocation2], 4
      %s72 = int_to_ptr.vmem [resolvable:$true] %s71
      %74 = dma.vmem_to_hbm [thread:$0]  %s72, 16, %s2, [#allocation3]
    $region17: #{tpu_custom_call.1} parent=1 // pred_fallthru
      _
    // Predicated region
    $region18: #{tpu_custom_call.1} parent=1 // pred_check
      _
    $region19: #{tpu_custom_call.1} parent=1 // pred_check_branch
      %76 = sbr.rel (0) target = $region21
    $region20: #{tpu_custom_call.1} parent=1 // pred_region
      %77 = dma.done [#allocation3], 16
    $region21: #{tpu_custom_call.1} parent=1 // pred_fallthru
      _
    %78 = vsyncpa [#allocation3], 1

</llo_original>
